<compile_context>
chip_gen: v5e
topology: v5e:2x2
jax: 0.10.0
libtpu: 0.0.40
codegen_flags: <defaults>
</compile_context>

<pallas_src>
import numpy as np
import jax
import jax.numpy as jnp
from jax.experimental import pallas as pl
from jax.experimental.pallas import tpu as pltpu


def _make_fused_kernel(num_layers, transpose_out):
    """Builds kernel(x_ref, w0, b0, ..., w_{L-1}, b_{L-1}, o_ref)."""

    def kernel(*refs):
        x_ref = refs[0]
        o_ref = refs[1 + 2 * num_layers]
        # h is [features, batch_block]; batch on the lane axis (lane-dense).
        h = x_ref[...]
        for j in range(num_layers):
            w = refs[1 + 2 * j][...]            # [out, in]  (PyTorch layout)
            b = refs[2 + 2 * j][...]            # [out, 1]
            rhs = h if h.dtype == w.dtype else h.astype(w.dtype)
            # MXU matmul, no transposes: [out,in] @ [in,B] -> [out,B].
            # bf16 operands OK; accumulation is always f32.
            y = jnp.dot(w, rhs, preferred_element_type=jnp.float32)
            y = y + b.astype(jnp.float32)
            # sigmoid(y) = 0.5*(tanh(y/2)+1): single EUP transcendental,
            # elementwise math kept in f32 (required on v5e).
            h = 0.5 * (jnp.tanh(0.5 * y) + 1.0)
        # Fuse the module's output orientation into the kernel: either write
        # the lane-dense [out, B] block or the transposed [B, out] block.
        out = h.T if transpose_out else h
        o_ref[...] = out.astype(o_ref.dtype)

    return kernel


def _default_block_b(batch):
    """Batch (lane-axis) tile size.

    The kernel is HBM/overhead bound, so large tiles amortize the ~0.35 us
    per-grid-step cost (256-wide tiles only reach ~63% of HBM roofline vs
    ~85%+ at 512-1024+).  When the batch is large we also cap at
    ceil(batch/2) (rounded to a 128-lane multiple) so the grid has >= 2
    "parallel" steps and both v7x TensorCores get work.  2048 is a safe sweet
    spot for v5e (spill / 16 MiB scoped VMEM) and v6e; on v7x sweeping
    block_b up to 4096-8192 is worthwhile.
    """
    if batch <= 256:
        return batch
    target = 2048
    bb = min(target, (batch + 1) // 2)
    bb = ((bb + 127) // 128) * 128            # lane-axis blocks: multiples of 128
    return min(bb, batch)


def fcnet_forward(x_in, weights, biases, *, block_b=None,
                  feature_major_output=False, out_dtype=jnp.float32):
    """FCNetTo.forward as one fused pallas_call.

    x_in    : [dims[0], batch]          (features x batch, as the module expects)
    weights : list of [out, in] arrays  (PyTorch nn.Linear convention); f32 or bf16
    biases  : list of [out] arrays
    returns : [batch, dims[-1]]                        (module layout, default)
              [dims[-1], batch] if feature_major_output (lane-dense, fastest,
              no transpose anywhere -- for consumers that can accept it).
    """
    d0, batch = x_in.shape
    num_layers = len(weights)
    out_dim = weights[-1].shape[0]

    if block_b is None:
        block_b = _default_block_b(batch)
    grid = (pl.cdiv(batch, block_b),)

    # Biases as [out, 1] columns so they broadcast over the batch (lane) axis.
    b_cols = [b.reshape(b.shape[0], 1) for b in biases]

    # Guard the all-weights-resident-in-VMEM assumption (v7x: 64 MiB per core;
    # params are double-buffered by the default pipeline).
    param_bytes = sum(int(w.size) * w.dtype.itemsize for w in weights)
    param_bytes += sum(int(b.size) * b.dtype.itemsize for b in b_cols)
    if 2 * param_bytes > 40 * (1 << 20):
        # TODO(synk): K/N-tiled accumulate fallback for very large hidden dims.
        raise ValueError(
            "FCNetTo weights too large for the all-resident-in-VMEM design "
            f"({param_bytes / 2**20:.1f} MiB); use bf16 weights or a tiled path.")

    in_specs = [pl.BlockSpec((d0, block_b), lambda i: (0, i))]
    params = []
    for w, b in zip(weights, b_cols):
        # Resident parameters (constant index_map).  On v7x with large hidden
        # dims, add pipeline_mode=pl.Buffered(1) here to single-buffer them.
        in_specs.append(pl.BlockSpec(w.shape, lambda i: (0, 0)))
        in_specs.append(pl.BlockSpec(b.shape, lambda i: (0, 0)))
        params.extend([w, b])

    out_itemsize = np.dtype(out_dtype).itemsize
    if feature_major_output:
        out_shape = jax.ShapeDtypeStruct((out_dim, batch), out_dtype)
        out_spec = pl.BlockSpec((out_dim, block_b), lambda i: (0, i))
    else:
        # Output transpose fused into the kernel: avoids a standalone XLA
        # transpose (an extra full HBM read+write pass of the output).
        out_shape = jax.ShapeDtypeStruct((batch, out_dim), out_dtype)
        out_spec = pl.BlockSpec((block_b, out_dim), lambda i: (i, 0))

    # Scoped-VMEM budget: pipelined x/out blocks (double-buffered), resident
    # params (double-buffered), live f32 intermediates, plus headroom.
    max_width = max([d0] + [w.shape[0] for w in weights])
    need = (2 * (d0 * block_b * x_in.dtype.itemsize
                 + block_b * out_dim * out_itemsize)
            + 2 * param_bytes
            + 2 * max_width * block_b * 4
            + (1 << 20))
    vmem_limit = int(min(64 * (1 << 20), max(32 * (1 << 20), need)))

    # Advisory cost estimate so XLA schedules surrounding ops around this call.
    flops = 2 * sum(w.shape[0] * w.shape[1] for w in weights) * batch
    transcendentals = sum(w.shape[0] for w in weights) * batch
    bytes_accessed = (int(x_in.size) * x_in.dtype.itemsize + param_bytes
                      + batch * out_dim * out_itemsize)

    return pl.pallas_call(
        _make_fused_kernel(num_layers, transpose_out=not feature_major_output),
        out_shape=out_shape,
        grid=grid,
        in_specs=in_specs,
        out_specs=out_spec,
        compiler_params=pltpu.CompilerParams(
            dimension_semantics=("parallel",),
            vmem_limit_bytes=vmem_limit),
        cost_estimate=pl.CostEstimate(
            flops=flops,
            transcendentals=transcendentals,
            bytes_accessed=bytes_accessed),
    )(x_in, *params)


def init_params(dims, key):
    """Deterministic nn.Linear-style init (uniform in +-1/sqrt(fan_in))."""
    weights, biases = [], []
    for j in range(len(dims) - 1):
        fan_in, fan_out = dims[j], dims[j + 1]
        key, kw, kb = jax.random.split(key, 3)
        bound = 1.0 / jnp.sqrt(fan_in)
        weights.append(jax.random.uniform(
            kw, (fan_out, fan_in), jnp.float32, -bound, bound))
        biases.append(jax.random.uniform(
            kb, (fan_out,), jnp.float32, -bound, bound))
    return weights, biases


def reference_forward(x_in, weights, biases):
    """Pure-JAX reference of FCNetTo.forward for correctness checking."""
    h = jnp.transpose(x_in, (1, 0))          # [batch, features]
    for w, b in zip(weights, biases):
        h = jax.nn.sigmoid(h @ w.T + b)
    return h


if __name__ == "__main__":
    # Module-consistent small shapes: dims = [16, 32, 8], batch = 128
    # (batch on the lane axis -> full 128-lane loads).
    dims = [16, 32, 8]
    batch = 128

    key = jax.random.PRNGKey(0)
    key, kx = jax.random.split(key)
    # FCNetTo expects x_in as [features, batch] (it transposes internally).
    x_in = jax.random.normal(kx, (dims[0], batch), jnp.float32)
    weights, biases = init_params(dims, key)

    ref = reference_forward(x_in, weights, biases)          # [batch, out]

    # 1) Default path: module-compatible [batch, out] output, transpose fused
    #    into the kernel (no extra XLA transpose pass through HBM).
    out = jax.block_until_ready(fcnet_forward(x_in, weights, biases))
    assert out.shape == (batch, dims[-1])
    assert jnp.allclose(out, ref, atol=1e-5, rtol=1e-5), "f32 mismatch vs reference"

    # 2) Feature-major path: [out, batch], lane-dense stores, no transpose at all.
    out_fm = jax.block_until_ready(
        fcnet_forward(x_in, weights, biases, feature_major_output=True))
    assert out_fm.shape == (dims[-1], batch)
    assert jnp.allclose(out_fm, ref.T, atol=1e-5, rtol=1e-5), "feature-major mismatch"

    # 3) bf16-stored inputs/weights (halved HBM traffic; 2x MXU on v6e/v7x);
    #    accumulation and elementwise math stay f32 inside the kernel.
    x_bf = x_in.astype(jnp.bfloat16)
    w_bf = [w.astype(jnp.bfloat16) for w in weights]
    out_bf = jax.block_until_ready(fcnet_forward(x_bf, w_bf, biases))
    assert jnp.allclose(out_bf, ref, atol=3e-2, rtol=3e-2), "bf16 mismatch vs reference"

    # TODO(synk): training pieces of FCNetTo (Adam, CrossEntropyLoss, y_pred/
    # metrics, fit loop) are outside the forward pass and are not implemented.

    print("KERNEL_OK")
</pallas_src>

<mosaic_0001>
module attributes {stable_mosaic.version = 11 : i64} {
  func.func @kernel(%arg0: i32, %arg1: memref<16x128xf32, #tpu.memory_space<vmem>>, %arg2: memref<32x16xf32, #tpu.memory_space<vmem>>, %arg3: memref<32x1xf32, #tpu.memory_space<vmem>>, %arg4: memref<8x32xf32, #tpu.memory_space<vmem>>, %arg5: memref<8x1xf32, #tpu.memory_space<vmem>>, %arg6: memref<128x8xf32, #tpu.memory_space<vmem>>) attributes {dimension_semantics = [#tpu.dimension_semantics<parallel>], iteration_bounds = array<i64: 1>, scalar_prefetch = 0 : i64, scratch_operands = 0 : i64, tpu.core_type = #tpu.core_type<tc>, window_params = [{transform_indices = @transform_0, window_bounds = array<i64: 16, 128>}, {pipeline_mode = #tpu.pipeline_mode<synchronous>, transform_indices = @transform_1, window_bounds = array<i64: 32, 16>}, {pipeline_mode = #tpu.pipeline_mode<synchronous>, transform_indices = @transform_2, window_bounds = array<i64: 32, 1>}, {pipeline_mode = #tpu.pipeline_mode<synchronous>, transform_indices = @transform_3, window_bounds = array<i64: 8, 32>}, {pipeline_mode = #tpu.pipeline_mode<synchronous>, transform_indices = @transform_4, window_bounds = array<i64: 8, 1>}, {transform_indices = @transform_5, window_bounds = array<i64: 128, 8>}]} {
    %c0 = arith.constant 0 : index
    %c0_0 = arith.constant 0 : index
    %0 = vector.load %arg1[%c0, %c0_0] : memref<16x128xf32, #tpu.memory_space<vmem>>, vector<16x128xf32>
    %c0_1 = arith.constant 0 : index
    %c0_2 = arith.constant 0 : index
    %1 = vector.load %arg2[%c0_1, %c0_2] : memref<32x16xf32, #tpu.memory_space<vmem>>, vector<32x16xf32>
    %c0_3 = arith.constant 0 : index
    %c0_4 = arith.constant 0 : index
    %2 = vector.load %arg3[%c0_3, %c0_4] : memref<32x1xf32, #tpu.memory_space<vmem>>, vector<32x1xf32>
    %cst = arith.constant dense<0.000000e+00> : vector<32x128xf32>
    %3 = tpu.matmul %1, %0, %cst {dimension_numbers = #tpu.dot_dimension_numbers<[1], [0], [0], [1], [0, 0, 1, 1], [], []>} : vector<32x16xf32>, vector<16x128xf32>, vector<32x128xf32> -> vector<32x128xf32>
    %4 = vector.broadcast %2 : vector<32x1xf32> to vector<32x128xf32>
    %5 = arith.addf %3, %4 : vector<32x128xf32>
    %cst_5 = arith.constant 5.000000e-01 : f32
    %6 = vector.broadcast %cst_5 : f32 to vector<32x128xf32>
    %7 = arith.mulf %6, %5 : vector<32x128xf32>
    %8 = math.tanh %7 : vector<32x128xf32>
    %cst_6 = arith.constant 1.000000e+00 : f32
    %9 = vector.broadcast %cst_6 : f32 to vector<32x128xf32>
    %10 = arith.addf %8, %9 : vector<32x128xf32>
    %cst_7 = arith.constant 5.000000e-01 : f32
    %11 = vector.broadcast %cst_7 : f32 to vector<32x128xf32>
    %12 = arith.mulf %11, %10 : vector<32x128xf32>
    %c0_8 = arith.constant 0 : index
    %c0_9 = arith.constant 0 : index
    %13 = vector.load %arg4[%c0_8, %c0_9] : memref<8x32xf32, #tpu.memory_space<vmem>>, vector<8x32xf32>
    %c0_10 = arith.constant 0 : index
    %c0_11 = arith.constant 0 : index
    %14 = vector.load %arg5[%c0_10, %c0_11] : memref<8x1xf32, #tpu.memory_space<vmem>>, vector<8x1xf32>
    %cst_12 = arith.constant dense<0.000000e+00> : vector<8x128xf32>
    %15 = tpu.matmul %13, %12, %cst_12 {dimension_numbers = #tpu.dot_dimension_numbers<[1], [0], [0], [1], [0, 0, 1, 1], [], []>} : vector<8x32xf32>, vector<32x128xf32>, vector<8x128xf32> -> vector<8x128xf32>
    %16 = vector.broadcast %14 : vector<8x1xf32> to vector<8x128xf32>
    %17 = arith.addf %15, %16 : vector<8x128xf32>
    %cst_13 = arith.constant 5.000000e-01 : f32
    %18 = vector.broadcast %cst_13 : f32 to vector<8x128xf32>
    %19 = arith.mulf %18, %17 : vector<8x128xf32>
    %20 = math.tanh %19 : vector<8x128xf32>
    %cst_14 = arith.constant 1.000000e+00 : f32
    %21 = vector.broadcast %cst_14 : f32 to vector<8x128xf32>
    %22 = arith.addf %20, %21 : vector<8x128xf32>
    %cst_15 = arith.constant 5.000000e-01 : f32
    %23 = vector.broadcast %cst_15 : f32 to vector<8x128xf32>
    %24 = arith.mulf %23, %22 : vector<8x128xf32>
    %25 = tpu.transpose %24, [1, 0] : vector<8x128xf32> -> vector<128x8xf32>
    %c0_16 = arith.constant 0 : index
    %c0_17 = arith.constant 0 : index
    %26 = vector.load %arg6[%c0_16, %c0_17] : memref<128x8xf32, #tpu.memory_space<vmem>>, vector<128x8xf32>
    tpu.vector_store %arg6[%c0_16, %c0_17], %25 {strides = array<i32>} : memref<128x8xf32, #tpu.memory_space<vmem>>, vector<128x8xf32>,
    return
  }
  func.func @transform_0(%arg0: i32) -> (i32, i32) {
    %c0_i32 = arith.constant 0 : i32
    %c0_i32_0 = arith.constant 0 : i32
    return %c0_i32, %arg0 : i32, i32
  }
  func.func @transform_1(%arg0: i32) -> (i32, i32) {
    %c0_i32 = arith.constant 0 : i32
    %c0_i32_0 = arith.constant 0 : i32
    %c0_i32_1 = arith.constant 0 : i32
    return %c0_i32, %c0_i32_0 : i32, i32
  }
  func.func @transform_2(%arg0: i32) -> (i32, i32) {
    %c0_i32 = arith.constant 0 : i32
    %c0_i32_0 = arith.constant 0 : i32
    %c0_i32_1 = arith.constant 0 : i32
    return %c0_i32, %c0_i32_0 : i32, i32
  }
  func.func @transform_3(%arg0: i32) -> (i32, i32) {
    %c0_i32 = arith.constant 0 : i32
    %c0_i32_0 = arith.constant 0 : i32
    %c0_i32_1 = arith.constant 0 : i32
    return %c0_i32, %c0_i32_0 : i32, i32
  }
  func.func @transform_4(%arg0: i32) -> (i32, i32) {
    %c0_i32 = arith.constant 0 : i32
    %c0_i32_0 = arith.constant 0 : i32
    %c0_i32_1 = arith.constant 0 : i32
    return %c0_i32, %c0_i32_0 : i32, i32
  }
  func.func @transform_5(%arg0: i32) -> (i32, i32) {
    %c0_i32 = arith.constant 0 : i32
    %c0_i32_0 = arith.constant 0 : i32
    return %arg0, %c0_i32 : i32, i32
  }
}

</mosaic_0001>

<llo_original>
// kernel: tpu_custom_call.1
$region0: #{tpu_custom_call.1}
  #allocation0 [shape = 'u32[]', space=smem, size = 0x4, offset = 0x4, fixed_abs, tag = 'smem constant byte address 0x4 - core index']
  #allocation1 [shape = 'u32[72,128]{1,0:T(1,128)}', space=vmem, size = 0x9000, scoped, tag = 'internal scratch']
  %s0 = inlined_call_operand.vmem [shape: f32[16,128], index: 0, kind: input, shape index: {}]
  %s1 = inlined_call_operand.vmem [shape: f32[32,16], index: 1, kind: input, shape index: {}]
  %s2 = inlined_call_operand.vmem [shape: f32[32,1], index: 2, kind: input, shape index: {}]
  %s3 = inlined_call_operand.vmem [shape: f32[8,32], index: 3, kind: input, shape index: {}]
  %s4 = inlined_call_operand.vmem [shape: f32[8,1], index: 4, kind: input, shape index: {}]
  %s5 = inlined_call_operand.vmem [shape: f32[128,8], index: 5, kind: output, shape index: {}]
  %s6 = sld [smem:[#allocation0]]
  $region30: #{tpu_custom_call.1} parent=0
    _
  %s8 = ssub.s32 1, %s6
  %s9 = scalar_select 0, %s8, %s6
  // Predicated region
  $region2: #{tpu_custom_call.1} parent=0 // pred_check
    _
  $region3: #{tpu_custom_call.1} parent=0 // pred_check_branch
    %11 = sbr.rel (0) target = $region5
  $region4: #{tpu_custom_call.1} parent=0 // pred_region
    _
  $region5: #{tpu_custom_call.1} parent=0 // pred_fallthru
    _
  // Predicated region
  $region6: #{tpu_custom_call.1} parent=0 // pred_check
    _
  $region7: #{tpu_custom_call.1} parent=0 // pred_check_branch
    %13 = sbr.rel (0) target = $region9
  $region8: #{tpu_custom_call.1} parent=0 // pred_region
    _
  $region9: #{tpu_custom_call.1} parent=0 // pred_fallthru
    _
  // Predicated region
  $region10: #{tpu_custom_call.1} parent=0 // pred_check
    _
  $region11: #{tpu_custom_call.1} parent=0 // pred_check_branch
    %15 = sbr.rel (0) target = $region13
  $region12: #{tpu_custom_call.1} parent=0 // pred_region
    _
  $region13: #{tpu_custom_call.1} parent=0 // pred_fallthru
    _
  // Predicated region
  $region14: #{tpu_custom_call.1} parent=0 // pred_check
    _
  $region15: #{tpu_custom_call.1} parent=0 // pred_check_branch
    %17 = sbr.rel (0) target = $region17
  $region16: #{tpu_custom_call.1} parent=0 // pred_region
    _
  $region17: #{tpu_custom_call.1} parent=0 // pred_fallthru
    _
  // Predicated region
  $region18: #{tpu_custom_call.1} parent=0 // pred_check
    _
  $region19: #{tpu_custom_call.1} parent=0 // pred_check_branch
    %19 = sbr.rel (0) target = $region21
  $region20: #{tpu_custom_call.1} parent=0 // pred_region
    _
  $region21: #{tpu_custom_call.1} parent=0 // pred_fallthru
    _
  %v20 = vld [vmem:[%s0] sm:$0xff]
  %v21 = vld [vmem:[%s0 + $0x8] sm:$0xff]
  %v22 = vld [vmem:[%s1] sm:$0xff]
  %v23 = vld [vmem:[%s1 + $0x8] sm:$0xff]
  %v24 = vld [vmem:[%s1 + $0x10] sm:$0xff]
  %v25 = vld [vmem:[%s1 + $0x18] sm:$0xff]
  %v26 = vld [vmem:[%s2] sm:$0xff]
  %v27 = vld [vmem:[%s2 + $0x8] sm:$0xff]
  %v28 = vld [vmem:[%s2 + $0x10] sm:$0xff]
  %v29 = vld [vmem:[%s2 + $0x18] sm:$0xff]
  %31 = vset.pattern.permute.xlu0 0
  %32 = vperm.xlu0 %31, %v26
  %v33 = vpop.permute.xlu0 %32
  %36 = vset.pattern.permute.xlu0 0
  %37 = vperm.xlu0 %36, %v27
  %v38 = vpop.permute.xlu0 %37
  %41 = vset.pattern.permute.xlu0 0
  %42 = vperm.xlu0 %41, %v28
  %v43 = vpop.permute.xlu0 %42
  %46 = vset.pattern.permute.xlu0 0
  %47 = vperm.xlu0 %46, %v29
  %v48 = vpop.permute.xlu0 %47
  %vm50 = vcmask 130048
  %v52 = vsel %vm50, %v22, 0
  %v55 = vsel %vm50, %v23, 0
  %v58 = vsel %vm50, %v24, 0
  %v61 = vsel %vm50, %v25, 0
  %63 = vmatpush.msra.mxu0 0.0
  %64 = vmatpush.msra.mxu0 0.0
  %65 = vmatpush.msra.mxu0 0.0
  %66 = vmatpush.msra.mxu0 0.0
  %67 = vmatpush.msra.mxu0 0.0
  %68 = vmatpush.msra.mxu0 0.0
  %69 = vmatpush.msra.mxu0 0.0
  %70 = vmatpush.msra.mxu0 0.0
  %71 = vmatpush.msra.mxu0 0.0
  %72 = vmatpush.msra.mxu0 0.0
  %73 = vmatpush.msra.mxu0 0.0
  %74 = vmatpush.msra.mxu0 0.0
  %75 = vmatpush.msra.mxu0 0.0
  %76 = vmatpush.msra.mxu0 0.0
  %77 = vmatpush.msra.mxu0 %v21
  %78 = vmatpush.msra.mxu0 %v20
  %79 = vmatmul.f32.gmra.mxu0 %v52
  %v80 = vpop.f32.mrf.mxu0
  %v81 = vadd.f32 %v33, %v80
  %82 = vmatmul.f32.gmra.mxu0 %v55
  %v83 = vpop.f32.mrf.mxu0
  %v84 = vadd.f32 %v38, %v83
  %85 = vmatmul.f32.gmra.mxu0 %v58
  %v86 = vpop.f32.mrf.mxu0
  %v87 = vadd.f32 %v43, %v86
  %88 = vmatmul.f32.gmra.mxu0 %v61
  %v89 = vpop.f32.mrf.mxu0
  %v90 = vadd.f32 %v48, %v89
  %91 = vdwg.mxu0
  %v92 = vmul.f32 %v81, 0.5
  %v93 = vmul.f32 %v84, 0.5
  %v94 = vmul.f32 %v87, 0.5
  %v95 = vmul.f32 %v90, 0.5
  %v96 = vtanh.pop %v92
  %v97 = vtanh.pop %v93
  %v98 = vtanh.pop %v94
  %v99 = vtanh.pop %v95
  %v100 = vadd.f32 %v96, 1.0
  %v101 = vadd.f32 %v97, 1.0
  %v102 = vadd.f32 %v98, 1.0
  %v103 = vadd.f32 %v99, 1.0
  %v104 = vmul.f32 %v100, 0.5
  %v105 = vmul.f32 %v101, 0.5
  %v106 = vmul.f32 %v102, 0.5
  %v107 = vmul.f32 %v103, 0.5
  %v108 = vld [vmem:[%s3] sm:$0xff]
  %v109 = vld [vmem:[%s4] sm:$0xff]
  %111 = vset.pattern.permute.xlu0 0
  %112 = vperm.xlu0 %111, %v109
  %v113 = vpop.permute.xlu0 %112
  %vm115 = vcmask 261120
  %v117 = vsel %vm115, %v108, 0
  %119 = vmatpush.msra.mxu0 0.0
  %120 = vmatpush.msra.mxu0 0.0
  %121 = vmatpush.msra.mxu0 0.0
  %122 = vmatpush.msra.mxu0 0.0
  %123 = vmatpush.msra.mxu0 0.0
  %124 = vmatpush.msra.mxu0 0.0
  %125 = vmatpush.msra.mxu0 0.0
  %126 = vmatpush.msra.mxu0 0.0
  %127 = vmatpush.msra.mxu0 0.0
  %128 = vmatpush.msra.mxu0 0.0
  %129 = vmatpush.msra.mxu0 0.0
  %130 = vmatpush.msra.mxu0 0.0
  %131 = vmatpush.msra.mxu0 %v107
  %132 = vmatpush.msra.mxu0 %v106
  %133 = vmatpush.msra.mxu0 %v105
  %134 = vmatpush.msra.mxu0 %v104
  %135 = vmatmul.f32.gmra.mxu0 %v117
  %v136 = vpop.f32.mrf.mxu0
  %v137 = vadd.f32 %v113, %v136
  %138 = vdwg.mxu0
  %v139 = vmul.f32 %v137, 0.5
  %v140 = vtanh.pop %v139
  %v141 = vadd.f32 %v140, 1.0
  %v142 = vmul.f32 %v141, 0.5
  %143 = vxpose.xlu0.b32.start [1/16] %v142, 128
  %144 = vxpose.xlu0.b32.cont [2/16] 0.0, 128
  %145 = vxpose.xlu0.b32.cont [3/16] 0.0, 128
  %146 = vxpose.xlu0.b32.cont [4/16] 0.0, 128
  %147 = vxpose.xlu0.b32.cont [5/16] 0.0, 128
  %148 = vxpose.xlu0.b32.cont [6/16] 0.0, 128
  %149 = vxpose.xlu0.b32.cont [7/16] 0.0, 128
  %150 = vxpose.xlu0.b32.cont [8/16] 0.0, 128
  %151 = vxpose.xlu0.b32.cont [9/16] 0.0, 128
  %152 = vxpose.xlu0.b32.cont [10/16] 0.0, 128
  %153 = vxpose.xlu0.b32.cont [11/16] 0.0, 128
  %154 = vxpose.xlu0.b32.cont [12/16] 0.0, 128
  %155 = vxpose.xlu0.b32.cont [13/16] 0.0, 128
  %156 = vxpose.xlu0.b32.cont [14/16] 0.0, 128
  %157 = vxpose.xlu0.b32.cont [15/16] 0.0, 128
  %158 = vxpose.xlu0.b32.end [16/16] 0.0, 128
  %v159 = vpop.trf.xlu0
  %v160 = vpop.trf.xlu0
  %v161 = vpop.trf.xlu0
  %v162 = vpop.trf.xlu0
  %v163 = vpop.trf.xlu0
  %v164 = vpop.trf.xlu0
  %v165 = vpop.trf.xlu0
  %v166 = vpop.trf.xlu0
  %v167 = vpop.trf.xlu0
  %v168 = vpop.trf.xlu0
  %v169 = vpop.trf.xlu0
  %v170 = vpop.trf.xlu0
  %v171 = vpop.trf.xlu0
  %v172 = vpop.trf.xlu0
  %v173 = vpop.trf.xlu0
  %v174 = vpop.trf.xlu0
  %vm175 = vcmask 64512
  %176 = vst.msk [vmem:[%s5] sm:$0xff] %vm175, %v159
  %177 = vst.msk [vmem:[%s5 + $0x8] sm:$0xff] %vm175, %v160
  %178 = vst.msk [vmem:[%s5 + $0x10] sm:$0xff] %vm175, %v161
  %179 = vst.msk [vmem:[%s5 + $0x18] sm:$0xff] %vm175, %v162
  %180 = vst.msk [vmem:[%s5 + $0x20] sm:$0xff] %vm175, %v163
  %181 = vst.msk [vmem:[%s5 + $0x28] sm:$0xff] %vm175, %v164
  %182 = vst.msk [vmem:[%s5 + $0x30] sm:$0xff] %vm175, %v165
  %183 = vst.msk [vmem:[%s5 + $0x38] sm:$0xff] %vm175, %v166
  %184 = vst.msk [vmem:[%s5 + $0x40] sm:$0xff] %vm175, %v167
  %185 = vst.msk [vmem:[%s5 + $0x48] sm:$0xff] %vm175, %v168
  %186 = vst.msk [vmem:[%s5 + $0x50] sm:$0xff] %vm175, %v169
  %187 = vst.msk [vmem:[%s5 + $0x58] sm:$0xff] %vm175, %v170
  %188 = vst.msk [vmem:[%s5 + $0x60] sm:$0xff] %vm175, %v171
  %189 = vst.msk [vmem:[%s5 + $0x68] sm:$0xff] %vm175, %v172
  %190 = vst.msk [vmem:[%s5 + $0x70] sm:$0xff] %vm175, %v173
  %191 = vst.msk [vmem:[%s5 + $0x78] sm:$0xff] %vm175, %v174
  // Predicated region
  $region22: #{tpu_custom_call.1} parent=0 // pred_check
    _
  $region23: #{tpu_custom_call.1} parent=0 // pred_check_branch
    %193 = sbr.rel (0) target = $region25
  $region24: #{tpu_custom_call.1} parent=0 // pred_region
    _
  $region25: #{tpu_custom_call.1} parent=0 // pred_fallthru
    _
  // Predicated region
  $region26: #{tpu_custom_call.1} parent=0 // pred_check
    _
  $region27: #{tpu_custom_call.1} parent=0 // pred_check_branch
    %195 = sbr.rel (0) target = $region29
  $region28: #{tpu_custom_call.1} parent=0 // pred_region
    _
  $region29: #{tpu_custom_call.1} parent=0 // pred_fallthru
    _

</llo_original>
